<compile_context>
chip_gen: v5e
topology: v5e:2x2
jax: 0.10.0
libtpu: 0.0.40
codegen_flags: <defaults>
</compile_context>

<pallas_src>
import jax
import jax.numpy as jnp
from jax.experimental import pallas as pl
from jax.experimental.pallas import tpu as pltpu


def _round_up(v, m):
    return ((v + m - 1) // m) * m


def _choose_tiles(n, fp, op):
    """Pick (row tile tm, contraction tile tk, padded node count npad)."""
    n8 = _round_up(n, 8)
    if n8 <= 512:
        # Single tile in both dimensions; grid is (1, 1).
        return n8, n8, n8
    tk = 512
    npad = _round_up(n, tk)
    # Largest row tile (<= 2048) that divides npad ...
    tm = 512
    for cand in (2048, 1024):
        if npad % cand == 0:
            tm = cand
            break

    # ... whose per-kernel working set stays well under the VMEM scoped limit
    # (safe on v5e/v6e 128 MiB and v7x 64 MiB).
    def _vmem(tm_):
        return (2 * tm_ * tk * 2            # double-buffered bf16 adjacency tile
                + 2 * tm_ * op * 4          # double-buffered f32 output tile
                + tm_ * max(fp, op) * 4)    # f32 accumulator scratch

    while tm > 512 and _vmem(tm) > 16 * 1024 * 1024:
        tm //= 2
    return tm, tk, npad


# ---------------------------------------------------------------------------
# Kernel A: layer 1 (+ fused layer-2 feature transform)
#   acc[t] += (A+I)[t, k] @ (dinv * X)[k]        (adj upcast bf16->f32, f32 MXU acc)
#   on last k:
#     h    = relu(dinv[t] * acc @ W1 + b1)
#     g[t] = dinv[t] * (h @ W2)                  (propagated operand for kernel B)
# ---------------------------------------------------------------------------
def _layer1_kernel(adj_ref, xs_ref, dinv_ref, w1_ref, b1_ref, w2_ref, g_ref, acc_ref):
    k = pl.program_id(1)

    @pl.when(k == 0)
    def _():
        acc_ref[...] = jnp.zeros_like(acc_ref)

    adj = adj_ref[...].astype(jnp.float32)                                   # [tm, tk]
    acc_ref[...] += jnp.dot(adj, xs_ref[...], preferred_element_type=jnp.float32)

    @pl.when(k == pl.num_programs(1) - 1)
    def _():
        ax = dinv_ref[...] * acc_ref[...]                                    # D^{-1/2} rows
        h = jnp.dot(ax, w1_ref[...], preferred_element_type=jnp.float32) + b1_ref[...]
        h = jnp.maximum(h, 0.0)                                              # ReLU (f32)
        g_ref[...] = dinv_ref[...] * jnp.dot(
            h, w2_ref[...], preferred_element_type=jnp.float32)              # [tm, Op]


# ---------------------------------------------------------------------------
# Kernel B: layer-2 propagation
#   acc[t] += (A+I)[t, k] @ g[k];   on last k:  out[t] = dinv[t] * acc + b2
# ---------------------------------------------------------------------------
def _layer2_kernel(adj_ref, g_ref, dinv_ref, b2_ref, out_ref, acc_ref):
    k = pl.program_id(1)

    @pl.when(k == 0)
    def _():
        acc_ref[...] = jnp.zeros_like(acc_ref)

    adj = adj_ref[...].astype(jnp.float32)
    acc_ref[...] += jnp.dot(adj, g_ref[...], preferred_element_type=jnp.float32)

    @pl.when(k == pl.num_programs(1) - 1)
    def _():
        out_ref[...] = dinv_ref[...] * acc_ref[...] + b2_ref[...]


def gnn_forward(x, edge_index, w1, b1, w2, b2):
    """Dense-GCN forward. x: [N, Fin] f32, edge_index: [2, E] int32."""
    N, fin = x.shape
    hid = w1.shape[1]
    out_dim = w2.shape[1]

    # ---- glue: raw (A + I) with scatter-ADD (duplicate edges counted, like PyG's
    # scatter-add message passing) and the symmetric-norm vector dinv = deg^{-1/2}.
    src, dst = edge_index[0], edge_index[1]
    adj = jnp.zeros((N, N), jnp.float32).at[dst, src].add(1.0)   # A[target, source]
    adj = adj + jnp.eye(N, dtype=jnp.float32)                    # self loops
    deg = jnp.sum(adj, axis=1)
    dinv = jnp.where(deg > 0, jax.lax.rsqrt(deg), 0.0)

    # ---- padding: feature dims lane-dense (multiple of 128), nodes to tile multiple
    fp = _round_up(fin, 128)
    hp = _round_up(hid, 128)
    op = _round_up(out_dim, 128)
    tm, tk, npad = _choose_tiles(N, fp, op)

    adj_p = jnp.zeros((npad, npad), jnp.bfloat16).at[:N, :N].set(adj.astype(jnp.bfloat16))
    xs = dinv[:, None] * x                                        # source-side D^{-1/2}
    xs_p = jnp.zeros((npad, fp), jnp.float32).at[:N, :fin].set(xs)
    dinv_p = jnp.zeros((npad, 1), jnp.float32).at[:N, 0].set(dinv)
    w1_p = jnp.zeros((fp, hp), jnp.float32).at[:fin, :hid].set(w1)
    b1_p = jnp.zeros((1, hp), jnp.float32).at[:, :hid].set(b1.reshape(1, hid))
    w2_p = jnp.zeros((hp, op), jnp.float32).at[:hid, :out_dim].set(w2)
    b2_p = jnp.zeros((1, op), jnp.float32).at[:, :out_dim].set(b2.reshape(1, out_dim))

    grid = (npad // tm, npad // tk)
    cparams = pltpu.CompilerParams(
        dimension_semantics=("parallel", "arbitrary"),  # rows across TCs, k reduction
        vmem_limit_bytes=32 * 1024 * 1024,              # safe on v5e/v6e/v7x
    )

    def full(shape):
        return pl.BlockSpec(shape, lambda i, k: (0,) * len(shape))

    adj_spec = pl.BlockSpec((tm, tk), lambda i, k: (i, k))    # streamed, pipelined
    dinv_spec = pl.BlockSpec((tm, 1), lambda i, k: (i, 0))
    out_spec = pl.BlockSpec((tm, op), lambda i, k: (i, 0))    # resident across k

    # ---- layer 1 (+ fused h @ W2) ----
    g = pl.pallas_call(
        _layer1_kernel,
        out_shape=jax.ShapeDtypeStruct((npad, op), jnp.float32),
        grid=grid,
        in_specs=[
            adj_spec,                                         # (A+I) tile (bf16)
            pl.BlockSpec((tk, fp), lambda i, k: (k, 0)),      # dinv-scaled X, k-tiled
            dinv_spec,                                        # dinv row tile
            full((fp, hp)),                                   # W1 (resident)
            full((1, hp)),                                    # b1
            full((hp, op)),                                   # W2 (resident)
        ],
        out_specs=out_spec,
        scratch_shapes=[pltpu.VMEM((tm, fp), jnp.float32)],   # A@X accumulator
        compiler_params=cparams,
        cost_estimate=pl.CostEstimate(
            flops=2 * npad * npad * fp + 2 * npad * fp * hp + 2 * npad * hp * op,
            transcendentals=0,
            bytes_accessed=npad * npad * 2
            + (npad // tm) * npad * fp * 4
            + npad * op * 4,
        ),
    )(adj_p, xs_p, dinv_p, w1_p, b1_p, w2_p)

    # ---- layer 2 propagation ----
    out_p = pl.pallas_call(
        _layer2_kernel,
        out_shape=jax.ShapeDtypeStruct((npad, op), jnp.float32),
        grid=grid,
        in_specs=[
            adj_spec,                                         # (A+I) tile (bf16)
            pl.BlockSpec((tk, op), lambda i, k: (k, 0)),      # g = dinv*(H@W2), k-tiled
            dinv_spec,                                        # dinv row tile
            full((1, op)),                                    # b2
        ],
        out_specs=out_spec,
        scratch_shapes=[pltpu.VMEM((tm, op), jnp.float32)],   # A@g accumulator
        compiler_params=cparams,
        cost_estimate=pl.CostEstimate(
            flops=2 * npad * npad * op,
            transcendentals=0,
            bytes_accessed=npad * npad * 2
            + (npad // tm) * npad * op * 4
            + npad * op * 4,
        ),
    )(adj_p, g, dinv_p, b2_p)

    return out_p[:N, :out_dim]


def init_params(key, input_dim, hidden_dim, output_dim):
    # Deterministic glorot-uniform weights (as in PyG GCNConv), zero biases.
    k1, k2 = jax.random.split(key)

    def glorot(k, fan_in, fan_out):
        limit = jnp.sqrt(6.0 / (fan_in + fan_out))
        return jax.random.uniform(
            k, (fan_in, fan_out), dtype=jnp.float32, minval=-limit, maxval=limit
        )

    w1 = glorot(k1, input_dim, hidden_dim)
    b1 = jnp.zeros((1, hidden_dim), dtype=jnp.float32)
    w2 = glorot(k2, hidden_dim, output_dim)
    b2 = jnp.zeros((1, output_dim), dtype=jnp.float32)
    return w1, b1, w2, b2


if __name__ == "__main__":
    # Small shapes consistent with the module's forward.
    N = 16            # number of nodes
    E = 32            # number of edges
    input_dim = 4
    hidden_dim = 32
    output_dim = 8

    key = jax.random.PRNGKey(0)
    kx, ke, kp = jax.random.split(key, 3)

    x = jax.random.normal(kx, (N, input_dim), dtype=jnp.float32)
    edge_index = jax.random.randint(ke, (2, E), 0, N, dtype=jnp.int32)

    w1, b1, w2, b2 = init_params(kp, input_dim, hidden_dim, output_dim)

    out = gnn_forward(x, edge_index, w1, b1, w2, b2)
    out = jax.block_until_ready(out)

    # Pure-JAX reference (same dense-GCN math, scatter-add edges) for sanity.
    src, dst = edge_index[0], edge_index[1]
    adj = jnp.zeros((N, N), jnp.float32).at[dst, src].add(1.0) + jnp.eye(N)
    deg = adj.sum(1)
    dinv = jnp.where(deg > 0, 1.0 / jnp.sqrt(deg), 0.0)
    adj_n = dinv[:, None] * adj * dinv[None, :]
    h_ref = jnp.maximum(adj_n @ (x @ w1) + b1, 0.0)
    ref = adj_n @ (h_ref @ w2) + b2
    assert jnp.allclose(out, ref, atol=1e-5, rtol=1e-5), "mismatch vs JAX reference"

    assert out.shape == (N, output_dim)
    print("KERNEL_OK")
</pallas_src>

<mosaic_0001>
module attributes {stable_mosaic.version = 11 : i64} {
  func.func @_layer1_kernel(%arg0: i32, %arg1: i32, %arg2: memref<16x16xbf16, #tpu.memory_space<vmem>>, %arg3: memref<16x128xf32, #tpu.memory_space<vmem>>, %arg4: memref<16x1xf32, #tpu.memory_space<vmem>>, %arg5: memref<128x128xf32, #tpu.memory_space<vmem>>, %arg6: memref<1x128xf32, #tpu.memory_space<vmem>>, %arg7: memref<128x128xf32, #tpu.memory_space<vmem>>, %arg8: memref<16x128xf32, #tpu.memory_space<vmem>>, %arg9: memref<16x128xf32, #tpu.memory_space<vmem>>) attributes {dimension_semantics = [#tpu.dimension_semantics<parallel>, #tpu.dimension_semantics<arbitrary>], iteration_bounds = array<i64: 1, 1>, scalar_prefetch = 0 : i64, scratch_operands = 1 : i64, tpu.core_type = #tpu.core_type<tc>, window_params = [{transform_indices = @transform_0, window_bounds = array<i64: 16, 16>}, {transform_indices = @transform_1, window_bounds = array<i64: 16, 128>}, {transform_indices = @transform_2, window_bounds = array<i64: 16, 1>}, {pipeline_mode = #tpu.pipeline_mode<synchronous>, transform_indices = @transform_3, window_bounds = array<i64: 128, 128>}, {pipeline_mode = #tpu.pipeline_mode<synchronous>, transform_indices = @transform_4, window_bounds = array<i64: 1, 128>}, {pipeline_mode = #tpu.pipeline_mode<synchronous>, transform_indices = @transform_5, window_bounds = array<i64: 128, 128>}, {transform_indices = @transform_6, window_bounds = array<i64: 16, 128>}]} {
    %c0_i32 = arith.constant 0 : i32
    %0 = arith.cmpi eq, %arg1, %c0_i32 : i32
    %1 = arith.extui %0 : i1 to i32
    %c0_i32_0 = arith.constant 0 : i32
    %2 = arith.cmpi ne, %1, %c0_i32_0 : i32
    scf.if %2 {
      %cst_10 = arith.constant 0.000000e+00 : f32
      %13 = vector.broadcast %cst_10 : f32 to vector<16x128xf32>
      %c0_11 = arith.constant 0 : index
      %c0_12 = arith.constant 0 : index
      %14 = vector.load %arg9[%c0_11, %c0_12] : memref<16x128xf32, #tpu.memory_space<vmem>>, vector<16x128xf32>
      tpu.vector_store %arg9[%c0_11, %c0_12], %13 {strides = array<i32>} : memref<16x128xf32, #tpu.memory_space<vmem>>, vector<16x128xf32>,
    } else {
    }
    %c0 = arith.constant 0 : index
    %c0_1 = arith.constant 0 : index
    %3 = vector.load %arg2[%c0, %c0_1] : memref<16x16xbf16, #tpu.memory_space<vmem>>, vector<16x16xbf16>
    %4 = arith.extf %3 : vector<16x16xbf16> to vector<16x16xf32>
    %c0_2 = arith.constant 0 : index
    %c0_3 = arith.constant 0 : index
    %5 = vector.load %arg9[%c0_2, %c0_3] : memref<16x128xf32, #tpu.memory_space<vmem>>, vector<16x128xf32>
    %c0_4 = arith.constant 0 : index
    %c0_5 = arith.constant 0 : index
    %6 = vector.load %arg3[%c0_4, %c0_5] : memref<16x128xf32, #tpu.memory_space<vmem>>, vector<16x128xf32>
    %cst = arith.constant dense<0.000000e+00> : vector<16x128xf32>
    %7 = tpu.matmul %4, %6, %cst {dimension_numbers = #tpu.dot_dimension_numbers<[1], [0], [0], [1], [0, 0, 1, 1], [], []>} : vector<16x16xf32>, vector<16x128xf32>, vector<16x128xf32> -> vector<16x128xf32>
    %8 = arith.addf %5, %7 : vector<16x128xf32>
    %c0_6 = arith.constant 0 : index
    %c0_7 = arith.constant 0 : index
    %9 = vector.load %arg9[%c0_6, %c0_7] : memref<16x128xf32, #tpu.memory_space<vmem>>, vector<16x128xf32>
    tpu.vector_store %arg9[%c0_6, %c0_7], %8 {strides = array<i32>} : memref<16x128xf32, #tpu.memory_space<vmem>>, vector<16x128xf32>,
    %c0_i32_8 = arith.constant 0 : i32
    %10 = arith.cmpi eq, %arg1, %c0_i32_8 : i32
    %11 = arith.extui %10 : i1 to i32
    %c0_i32_9 = arith.constant 0 : i32
    %12 = arith.cmpi ne, %11, %c0_i32_9 : i32
    scf.if %12 {
      %c0_10 = arith.constant 0 : index
      %c0_11 = arith.constant 0 : index
      %13 = vector.load %arg4[%c0_10, %c0_11] : memref<16x1xf32, #tpu.memory_space<vmem>>, vector<16x1xf32>
      %c0_12 = arith.constant 0 : index
      %c0_13 = arith.constant 0 : index
      %14 = vector.load %arg9[%c0_12, %c0_13] : memref<16x128xf32, #tpu.memory_space<vmem>>, vector<16x128xf32>
      %15 = vector.broadcast %13 : vector<16x1xf32> to vector<16x128xf32>
      %16 = arith.mulf %15, %14 : vector<16x128xf32>
      %c0_14 = arith.constant 0 : index
      %c0_15 = arith.constant 0 : index
      %17 = vector.load %arg5[%c0_14, %c0_15] : memref<128x128xf32, #tpu.memory_space<vmem>>, vector<128x128xf32>
      %cst_16 = arith.constant dense<0.000000e+00> : vector<16x128xf32>
      %18 = tpu.matmul %16, %17, %cst_16 {dimension_numbers = #tpu.dot_dimension_numbers<[1], [0], [0], [1], [0, 0, 1, 1], [], []>} : vector<16x128xf32>, vector<128x128xf32>, vector<16x128xf32> -> vector<16x128xf32>
      %c0_17 = arith.constant 0 : index
      %c0_18 = arith.constant 0 : index
      %19 = vector.load %arg6[%c0_17, %c0_18] : memref<1x128xf32, #tpu.memory_space<vmem>>, vector<1x128xf32>
      %20 = vector.broadcast %19 : vector<1x128xf32> to vector<16x128xf32>
      %21 = arith.addf %18, %20 : vector<16x128xf32>
      %cst_19 = arith.constant 0.000000e+00 : f32
      %22 = vector.broadcast %cst_19 : f32 to vector<16x128xf32>
      %23 = arith.maximumf %21, %22 : vector<16x128xf32>
      %c0_20 = arith.constant 0 : index
      %c0_21 = arith.constant 0 : index
      %24 = vector.load %arg4[%c0_20, %c0_21] : memref<16x1xf32, #tpu.memory_space<vmem>>, vector<16x1xf32>
      %c0_22 = arith.constant 0 : index
      %c0_23 = arith.constant 0 : index
      %25 = vector.load %arg7[%c0_22, %c0_23] : memref<128x128xf32, #tpu.memory_space<vmem>>, vector<128x128xf32>
      %cst_24 = arith.constant dense<0.000000e+00> : vector<16x128xf32>
      %26 = tpu.matmul %23, %25, %cst_24 {dimension_numbers = #tpu.dot_dimension_numbers<[1], [0], [0], [1], [0, 0, 1, 1], [], []>} : vector<16x128xf32>, vector<128x128xf32>, vector<16x128xf32> -> vector<16x128xf32>
      %27 = vector.broadcast %24 : vector<16x1xf32> to vector<16x128xf32>
      %28 = arith.mulf %27, %26 : vector<16x128xf32>
      %c0_25 = arith.constant 0 : index
      %c0_26 = arith.constant 0 : index
      %29 = vector.load %arg8[%c0_25, %c0_26] : memref<16x128xf32, #tpu.memory_space<vmem>>, vector<16x128xf32>
      tpu.vector_store %arg8[%c0_25, %c0_26], %28 {strides = array<i32>} : memref<16x128xf32, #tpu.memory_space<vmem>>, vector<16x128xf32>,
    } else {
    }
    return
  }
  func.func @transform_0(%arg0: i32, %arg1: i32) -> (i32, i32) {
    %c0_i32 = arith.constant 0 : i32
    return %arg0, %arg1 : i32, i32
  }
  func.func @transform_1(%arg0: i32, %arg1: i32) -> (i32, i32) {
    %c0_i32 = arith.constant 0 : i32
    %c0_i32_0 = arith.constant 0 : i32
    return %arg1, %c0_i32 : i32, i32
  }
  func.func @transform_2(%arg0: i32, %arg1: i32) -> (i32, i32) {
    %c0_i32 = arith.constant 0 : i32
    %c0_i32_0 = arith.constant 0 : i32
    return %arg0, %c0_i32 : i32, i32
  }
  func.func @transform_3(%arg0: i32, %arg1: i32) -> (i32, i32) {
    %c0_i32 = arith.constant 0 : i32
    %c0_i32_0 = arith.constant 0 : i32
    %c0_i32_1 = arith.constant 0 : i32
    return %c0_i32, %c0_i32_0 : i32, i32
  }
  func.func @transform_4(%arg0: i32, %arg1: i32) -> (i32, i32) {
    %c0_i32 = arith.constant 0 : i32
    %c0_i32_0 = arith.constant 0 : i32
    %c0_i32_1 = arith.constant 0 : i32
    return %c0_i32, %c0_i32_0 : i32, i32
  }
  func.func @transform_5(%arg0: i32, %arg1: i32) -> (i32, i32) {
    %c0_i32 = arith.constant 0 : i32
    %c0_i32_0 = arith.constant 0 : i32
    %c0_i32_1 = arith.constant 0 : i32
    return %c0_i32, %c0_i32_0 : i32, i32
  }
  func.func @transform_6(%arg0: i32, %arg1: i32) -> (i32, i32) {
    %c0_i32 = arith.constant 0 : i32
    %c0_i32_0 = arith.constant 0 : i32
    return %arg0, %c0_i32 : i32, i32
  }
}

</mosaic_0001>

<llo_original>
// kernel: tpu_custom_call.1
$region0: #{tpu_custom_call.1}
  #allocation0 [shape = 'u32[]', space=smem, size = 0x4, offset = 0x4, fixed_abs, tag = 'smem constant byte address 0x4 - core index']
  #allocation1 [shape = 'u32[72,128]{1,0:T(1,128)}', space=vmem, size = 0x9000, scoped, tag = 'internal scratch']
  #allocation2 [shape = 'f32[16,128]{1,0:T(8,128)}', space=vmem, size = 0x2000, scoped, tag = 'scratch operand']
  %s0 = inlined_call_operand.hbm [shape: bf16[16,16], index: 0, kind: input, shape index: {}]
  %s1 = inlined_call_operand.vmem [shape: f32[16,128], index: 1, kind: input, shape index: {}]
  %s2 = inlined_call_operand.vmem [shape: f32[16,1], index: 2, kind: input, shape index: {}]
  %s3 = inlined_call_operand.hbm [shape: f32[128,128], index: 3, kind: input, shape index: {}]
  %s4 = inlined_call_operand.vmem [shape: f32[1,128], index: 4, kind: input, shape index: {}]
  %s5 = inlined_call_operand.hbm [shape: f32[128,128], index: 5, kind: input, shape index: {}]
  %s6 = inlined_call_operand.hbm [shape: f32[16,128], index: 6, kind: output, shape index: {}]
  %s7 = sld [smem:[#allocation0]]
  $region54: #{tpu_custom_call.1} parent=0
    _
  %s9 = ssub.s32 1, %s7
  %s10 = scalar_select 0, %s9, %s7
  $region1: #{tpu_custom_call.1} parent=0
    #allocation3 [shape = 'u8[4096]{0}', space=vmem, size = 0x1000, scoped, tag = 'input window, operand 0, single buffered']
    #allocation4 [shape = 's32[1]{0}', space=sflag, size = 0x4, scoped, tag = 'scoped memory for tpu_custom_call.1']
    #allocation5 [shape = 's32[1]{0}', space=sflag, size = 0x4, scoped, tag = 'scoped memory for tpu_custom_call.1']
    #allocation6 [shape = 'u8[65536]{0}', space=vmem, size = 0x10000, scoped, tag = 'input window, operand 3, single buffered']
    #allocation7 [shape = 's32[1]{0}', space=sflag, size = 0x4, scoped, tag = 'scoped memory for tpu_custom_call.1']
    #allocation8 [shape = 'u8[65536]{0}', space=vmem, size = 0x10000, scoped, tag = 'input window, operand 5, single buffered']
    #allocation9 [shape = 'u8[8192]{0}', space=vmem, size = 0x2000, scoped, tag = 'output window, operand 0, single buffered']
    %11 = vsyncpa [#allocation4], 0
    %12 = vsyncpa [#allocation7], 0
    %13 = vsyncpa [#allocation5], 0
    // Predicated region
    $region2: #{tpu_custom_call.1} parent=1 // pred_check
      _
    $region3: #{tpu_custom_call.1} parent=1 // pred_check_branch
      %15 = sbr.rel (0) target = $region5
    $region4: #{tpu_custom_call.1} parent=1 // pred_region
      %17 = vsyncadd [#allocation4], 0
      %s18 = sshll.u32 %s0, 4
      %s19 = int_to_ptr.hbm [resolvable:$true] %s18
      %s20 = sshll.u32 [#allocation3], 4
      %s21 = int_to_ptr.vmem [resolvable:$true] %s20
      %26 = dma.hbm_to_vmem [thread:$0]  %s19, 128, %s21, [#allocation4], 64, 64, 4
    $region5: #{tpu_custom_call.1} parent=1 // pred_fallthru
      _
    // Predicated region
    $region6: #{tpu_custom_call.1} parent=1 // pred_check
      _
    $region7: #{tpu_custom_call.1} parent=1 // pred_check_branch
      %28 = sbr.rel (0) target = $region9
    $region8: #{tpu_custom_call.1} parent=1 // pred_region
      _
    $region9: #{tpu_custom_call.1} parent=1 // pred_fallthru
      _
    // Predicated region
    $region10: #{tpu_custom_call.1} parent=1 // pred_check
      _
    $region11: #{tpu_custom_call.1} parent=1 // pred_check_branch
      %30 = sbr.rel (0) target = $region13
    $region12: #{tpu_custom_call.1} parent=1 // pred_region
      _
    $region13: #{tpu_custom_call.1} parent=1 // pred_fallthru
      _
    // Predicated region
    $region14: #{tpu_custom_call.1} parent=1 // pred_check
      _
    $region15: #{tpu_custom_call.1} parent=1 // pred_check_branch
      %32 = sbr.rel (0) target = $region17
    $region16: #{tpu_custom_call.1} parent=1 // pred_region
      %34 = vsyncadd [#allocation7], 0
      %s35 = sshll.u32 %s3, 4
      %s36 = int_to_ptr.hbm [resolvable:$true] %s35
      %s37 = sshll.u32 [#allocation6], 4
      %s38 = int_to_ptr.vmem [resolvable:$true] %s37
      %43 = dma.hbm_to_vmem [thread:$0]  %s36, 2048, %s38, [#allocation7], 128, 128, 8
    $region17: #{tpu_custom_call.1} parent=1 // pred_fallthru
      _
    // Predicated region
    $region18: #{tpu_custom_call.1} parent=1 // pred_check
      _
    $region19: #{tpu_custom_call.1} parent=1 // pred_check_branch
      %45 = sbr.rel (0) target = $region21
    $region20: #{tpu_custom_call.1} parent=1 // pred_region
      _
    $region21: #{tpu_custom_call.1} parent=1 // pred_fallthru
      _
    // Predicated region
    $region22: #{tpu_custom_call.1} parent=1 // pred_check
      _
    $region23: #{tpu_custom_call.1} parent=1 // pred_check_branch
      %47 = sbr.rel (0) target = $region25
    $region24: #{tpu_custom_call.1} parent=1 // pred_region
      %49 = vsyncadd [#allocation7], 0
      %s50 = sshll.u32 %s5, 4
      %s51 = int_to_ptr.hbm [resolvable:$true] %s50
      %s52 = sshll.u32 [#allocation8], 4
      %s53 = int_to_ptr.vmem [resolvable:$true] %s52
      %58 = dma.hbm_to_vmem [thread:$0]  %s51, 2048, %s53, [#allocation7], 128, 128, 8
    $region25: #{tpu_custom_call.1} parent=1 // pred_fallthru
      _
    // Predicated region
    $region26: #{tpu_custom_call.1} parent=1 // pred_check
      _
    $region27: #{tpu_custom_call.1} parent=1 // pred_check_branch
      %60 = sbr.rel (0) target = $region29
    $region28: #{tpu_custom_call.1} parent=1 // pred_region
      %62 = dma.done [#allocation4], 128
    $region29: #{tpu_custom_call.1} parent=1 // pred_fallthru
      _
    // Predicated region
    $region30: #{tpu_custom_call.1} parent=1 // pred_check
      _
    $region31: #{tpu_custom_call.1} parent=1 // pred_check_branch
      %64 = sbr.rel (0) target = $region33
    $region32: #{tpu_custom_call.1} parent=1 // pred_region
      %66 = dma.done [#allocation7], 2048
    $region33: #{tpu_custom_call.1} parent=1 // pred_fallthru
      _
    // Predicated region
    $region34: #{tpu_custom_call.1} parent=1 // pred_check
      _
    $region35: #{tpu_custom_call.1} parent=1 // pred_check_branch
      %68 = sbr.rel (0) target = $region37
    $region36: #{tpu_custom_call.1} parent=1 // pred_region
      %70 = dma.done [#allocation7], 2048
    $region37: #{tpu_custom_call.1} parent=1 // pred_fallthru
      _
    %p71 = scmp.eq.s32.totalorder 0, 0
    // Predicated region
    $region38: #{tpu_custom_call.1} parent=1 // pred_check
      %p72 = pneg %p71
    $region39: #{tpu_custom_call.1} parent=1 // pred_check_branch
      %74 = sbr.rel (%p72) target = $region41
    $region40: #{tpu_custom_call.1} parent=1 // pred_region
      %75 = vst [vmem:[#allocation2] sm:$0xff] 0.0
      %76 = vst [vmem:[#allocation2 + $0x8] sm:$0xff] 0.0
    $region41: #{tpu_custom_call.1} parent=1 // pred_fallthru
      _
    %v77 = vld [vmem:[#allocation3] sm:$0xf]
    %v78 = vld [vmem:[#allocation3 + $0x4] sm:$0xf]
    %v79 = vunpack.c.l.bf16 %v77
    %v80 = vunpack.c.l.bf16 %v78
    %v81 = vld [vmem:[#allocation2] sm:$0xff]
    %v82 = vld [vmem:[#allocation2 + $0x8] sm:$0xff]
    %v83 = vld [vmem:[%s1] sm:$0xff]
    %v84 = vld [vmem:[%s1 + $0x8] sm:$0xff]
    %vm85 = vcmask 130048
    %v87 = vsel %vm85, %v79, 0
    %v90 = vsel %vm85, %v80, 0
    %92 = vmatpush.msra.mxu0 0.0
    %93 = vmatpush.msra.mxu0 0.0
    %94 = vmatpush.msra.mxu0 0.0
    %95 = vmatpush.msra.mxu0 0.0
    %96 = vmatpush.msra.mxu0 0.0
    %97 = vmatpush.msra.mxu0 0.0
    %98 = vmatpush.msra.mxu0 0.0
    %99 = vmatpush.msra.mxu0 0.0
    %100 = vmatpush.msra.mxu0 0.0
    %101 = vmatpush.msra.mxu0 0.0
    %102 = vmatpush.msra.mxu0 0.0
    %103 = vmatpush.msra.mxu0 0.0
    %104 = vmatpush.msra.mxu0 0.0
    %105 = vmatpush.msra.mxu0 0.0
    %106 = vmatpush.msra.mxu0 %v84
    %107 = vmatpush.msra.mxu0 %v83
    %108 = vmatmul.f32.gmra.mxu0 %v87
    %v109 = vpop.f32.mrf.mxu0
    %v110 = vadd.f32 0.0, %v109
    %111 = vmatmul.f32.gmra.mxu0 %v90
    %v112 = vpop.f32.mrf.mxu0
    %v113 = vadd.f32 0.0, %v112
    %114 = vdwg.mxu0
    %v115 = vadd.f32 %v81, %v110
    %v116 = vadd.f32 %v82, %v113
    %117 = vst [vmem:[#allocation2] sm:$0xff] %v115
    %118 = vst [vmem:[#allocation2 + $0x8] sm:$0xff] %v116
    // Predicated region
    $region42: #{tpu_custom_call.1} parent=1 // pred_check
      %p119 = pneg %p71
    $region43: #{tpu_custom_call.1} parent=1 // pred_check_branch
      %121 = sbr.rel (%p119) target = $region45
    $region44: #{tpu_custom_call.1} parent=1 // pred_region
      %v122 = vld [vmem:[%s2] sm:$0xff]
      %v123 = vld [vmem:[%s2 + $0x8] sm:$0xff]
      %v124 = vld [vmem:[#allocation2] sm:$0xff]
      %v125 = vld [vmem:[#allocation2 + $0x8] sm:$0xff]
      %127 = vset.pattern.permute.xlu0 0
      %128 = vperm.xlu0 %127, %v122
      %v129 = vpop.permute.xlu0 %128
      %132 = vset.pattern.permute.xlu0 0
      %133 = vperm.xlu0 %132, %v123
      %v134 = vpop.permute.xlu0 %133
      %v136 = vmul.f32 %v129, %v124
      %v137 = vmul.f32 %v134, %v125
      %v138 = vld [vmem:[#allocation6] sm:$0xff]
      %v139 = vld [vmem:[#allocation6 + $0x8] sm:$0xff]
      %v140 = vld [vmem:[#allocation6 + $0x10] sm:$0xff]
      %v141 = vld [vmem:[#allocation6 + $0x18] sm:$0xff]
      %v142 = vld [vmem:[#allocation6 + $0x20] sm:$0xff]
      %v143 = vld [vmem:[#allocation6 + $0x28] sm:$0xff]
      %v144 = vld [vmem:[#allocation6 + $0x30] sm:$0xff]
      %v145 = vld [vmem:[#allocation6 + $0x38] sm:$0xff]
      %v146 = vld [vmem:[#allocation6 + $0x40] sm:$0xff]
      %v147 = vld [vmem:[#allocation6 + $0x48] sm:$0xff]
      %v148 = vld [vmem:[#allocation6 + $0x50] sm:$0xff]
      %v149 = vld [vmem:[#allocation6 + $0x58] sm:$0xff]
      %v150 = vld [vmem:[#allocation6 + $0x60] sm:$0xff]
      %v151 = vld [vmem:[#allocation6 + $0x68] sm:$0xff]
      %v152 = vld [vmem:[#allocation6 + $0x70] sm:$0xff]
      %v153 = vld [vmem:[#allocation6 + $0x78] sm:$0xff]
      %v154 = vld [vmem:[%s4] sm:$0x1]
      %v156 = vperm.slane %v154, 0
      %158 = vmatpush.msra.mxu0 %v153
      %159 = vmatpush.msra.mxu0 %v152
      %160 = vmatpush.msra.mxu0 %v151
      %161 = vmatpush.msra.mxu0 %v150
      %162 = vmatpush.msra.mxu0 %v149
      %163 = vmatpush.msra.mxu0 %v148
      %164 = vmatpush.msra.mxu0 %v147
      %165 = vmatpush.msra.mxu0 %v146
      %166 = vmatpush.msra.mxu0 %v145
      %167 = vmatpush.msra.mxu0 %v144
      %168 = vmatpush.msra.mxu0 %v143
      %169 = vmatpush.msra.mxu0 %v142
      %170 = vmatpush.msra.mxu0 %v141
      %171 = vmatpush.msra.mxu0 %v140
      %172 = vmatpush.msra.mxu0 %v139
      %173 = vmatpush.msra.mxu0 %v138
      %174 = vmatmul.f32.gmra.mxu0 %v136
      %v175 = vpop.f32.mrf.mxu0
      %v176 = vadd.f32 %v156, %v175
      %177 = vmatmul.f32.gmra.mxu0 %v137
      %v178 = vpop.f32.mrf.mxu0
      %v179 = vadd.f32 %v156, %v178
      %180 = vdwg.mxu0
      %v181 = vmax.f32 %v176, 0.0
      %v182 = vmax.f32 %v179, 0.0
      %v183 = vld [vmem:[#allocation8] sm:$0xff]
      %v184 = vld [vmem:[#allocation8 + $0x8] sm:$0xff]
      %v185 = vld [vmem:[#allocation8 + $0x10] sm:$0xff]
      %v186 = vld [vmem:[#allocation8 + $0x18] sm:$0xff]
      %v187 = vld [vmem:[#allocation8 + $0x20] sm:$0xff]
      %v188 = vld [vmem:[#allocation8 + $0x28] sm:$0xff]
      %v189 = vld [vmem:[#allocation8 + $0x30] sm:$0xff]
      %v190 = vld [vmem:[#allocation8 + $0x38] sm:$0xff]
      %v191 = vld [vmem:[#allocation8 + $0x40] sm:$0xff]
      %v192 = vld [vmem:[#allocation8 + $0x48] sm:$0xff]
      %v193 = vld [vmem:[#allocation8 + $0x50] sm:$0xff]
      %v194 = vld [vmem:[#allocation8 + $0x58] sm:$0xff]
      %v195 = vld [vmem:[#allocation8 + $0x60] sm:$0xff]
      %v196 = vld [vmem:[#allocation8 + $0x68] sm:$0xff]
      %v197 = vld [vmem:[#allocation8 + $0x70] sm:$0xff]
      %v198 = vld [vmem:[#allocation8 + $0x78] sm:$0xff]
      %199 = vmatpush.msra.mxu0 %v198
      %200 = vmatpush.msra.mxu0 %v197
      %201 = vmatpush.msra.mxu0 %v196
      %202 = vmatpush.msra.mxu0 %v195
      %203 = vmatpush.msra.mxu0 %v194
      %204 = vmatpush.msra.mxu0 %v193
      %205 = vmatpush.msra.mxu0 %v192
      %206 = vmatpush.msra.mxu0 %v191
      %207 = vmatpush.msra.mxu0 %v190
      %208 = vmatpush.msra.mxu0 %v189
      %209 = vmatpush.msra.mxu0 %v188
      %210 = vmatpush.msra.mxu0 %v187
      %211 = vmatpush.msra.mxu0 %v186
      %212 = vmatpush.msra.mxu0 %v185
      %213 = vmatpush.msra.mxu0 %v184
      %214 = vmatpush.msra.mxu0 %v183
      %215 = vmatmul.f32.gmra.mxu0 %v181
      %v216 = vpop.f32.mrf.mxu0
      %v217 = vadd.f32 0.0, %v216
      %218 = vmatmul.f32.gmra.mxu0 %v182
      %v219 = vpop.f32.mrf.mxu0
      %v220 = vadd.f32 0.0, %v219
      %221 = vdwg.mxu0
      %v222 = vmul.f32 %v129, %v217
      %v223 = vmul.f32 %v134, %v220
      %224 = vst [vmem:[#allocation9] sm:$0xff] %v222
      %225 = vst [vmem:[#allocation9 + $0x8] sm:$0xff] %v223
    $region45: #{tpu_custom_call.1} parent=1 // pred_fallthru
      _
    // Predicated region
    $region46: #{tpu_custom_call.1} parent=1 // pred_check
      _
    $region47: #{tpu_custom_call.1} parent=1 // pred_check_branch
      %227 = sbr.rel (0) target = $region49
    $region48: #{tpu_custom_call.1} parent=1 // pred_region
      %229 = vsyncadd [#allocation5], 0
      %s230 = sshll.u32 [#allocation9], 4
      %s231 = int_to_ptr.vmem [resolvable:$true] %s230
      %s232 = sshll.u32 %s6, 4
      %s233 = int_to_ptr.hbm [resolvable:$true] %s232
      %238 = dma.vmem_to_hbm [thread:$0]  %s231, 256, %s233, [#allocation5], 128, 128, 8
    $region49: #{tpu_custom_call.1} parent=1 // pred_fallthru
      _
    // Predicated region
    $region50: #{tpu_custom_call.1} parent=1 // pred_check
      _
    $region51: #{tpu_custom_call.1} parent=1 // pred_check_branch
      %240 = sbr.rel (0) target = $region53
    $region52: #{tpu_custom_call.1} parent=1 // pred_region
      %242 = dma.done [#allocation5], 256
    $region53: #{tpu_custom_call.1} parent=1 // pred_fallthru
      _
    %243 = vsyncpa [#allocation4], 1
    %244 = vsyncpa [#allocation7], 1
    %245 = vsyncpa [#allocation5], 1

</llo_original>
